<compile_context>
chip_gen: v5e
topology: v5e:2x2
jax: 0.10.0
libtpu: 0.0.40
codegen_flags: <defaults>
</compile_context>

<pallas_src>
import functools

import jax
import jax.numpy as jnp
from jax.experimental import pallas as pl
from jax.experimental.pallas import tpu as pltpu


def fused_sage_kernel(*refs, n_layers):
    """refs = (A_0..A_{L-1}, X, [Wpacked_l, b_l] * L, out)."""
    a_refs = refs[:n_layers]
    x_ref = refs[n_layers]
    p_refs = refs[n_layers + 1 : n_layers + 1 + 2 * n_layers]
    o_ref = refs[-1]

    h_bf = x_ref[...]                              # bf16 features, stays on-chip
    out = None
    for l in range(n_layers):
        w = p_refs[2 * l][...]                     # (F_in, 2*F_out) bf16 = [Ws | Wn]
        b = p_refs[2 * l + 1][...]                 # (1, F_out)      f32
        a = a_refs[l][...]                         # (N, N)          bf16 row-normalized
        f_out = b.shape[-1]

        # One projection matmul covers both branches: H @ [Ws | Wn].
        hw = jnp.dot(h_bf, w, preferred_element_type=jnp.float32)     # (N, 2*F_out) f32
        # Mean-aggregate after projecting: A @ (H @ Wn)  ==  (A @ H) @ Wn.
        neigh = jnp.dot(a, hw[:, f_out:].astype(jnp.bfloat16),
                        preferred_element_type=jnp.float32)           # (N, F_out) f32
        out = hw[:, :f_out] + neigh + b
        if l != n_layers - 1:
            out = jnp.maximum(out, 0.0)            # ReLU in f32 on the VPU (v5e-safe)
            h_bf = out.astype(jnp.bfloat16)

    # Output width (n_classes=8) is lane-masked on store; negligible at this N.
    o_ref[...] = out.astype(o_ref.dtype)


def pack_params(params):
    """One-time (model-load) preprocessing: pack [Ws | Wn] along F_out, bf16."""
    packed = []
    for w_s, w_n, b in params:
        w = jnp.concatenate([w_s, w_n], axis=1).astype(jnp.bfloat16)  # (F_in, 2*F_out)
        packed.append((w, b.astype(jnp.float32)))
    return packed


def sage_forward(blocks, x, packed_params):
    """Mirror of SAGE.forward (eval mode), fully fused into one pallas_call.

    `blocks` and `x` must already be bf16 (cast once upstream, not per call).
    """
    n_layers = len(packed_params)
    assert len(blocks) == n_layers
    n = x.shape[0]
    n_classes = packed_params[-1][1].shape[-1]
    assert x.dtype == jnp.bfloat16
    for a in blocks:
        assert a.shape == (n, n) and a.dtype == jnp.bfloat16

    flat_params = []
    for w, b in packed_params:
        flat_params += [w, b]
    operands = [*blocks, x, *flat_params]

    kernel = functools.partial(fused_sage_kernel, n_layers=n_layers)

    # No grid: single invocation, every operand resident in VMEM, no pipeline
    # state machine and no double-buffering.
    return pl.pallas_call(
        kernel,
        out_shape=jax.ShapeDtypeStruct((n, n_classes), jnp.float32),
        in_specs=[pl.BlockSpec(memory_space=pltpu.MemorySpace.VMEM)
                  for _ in operands],
        out_specs=pl.BlockSpec(memory_space=pltpu.MemorySpace.VMEM),
    )(*operands)


def sage_forward_ref(blocks, x, params, mirror_kernel=False):
    """Pure-JAX reference.

    mirror_kernel=True mirrors the kernel's bf16 casts, packed weights and the
    A@(H@Wn) association; False is the exact f32 math of the original module.
    """
    n_layers = len(params)
    if mirror_kernel:
        h_bf = x.astype(jnp.bfloat16)
        out = None
        for l, (a, (w_s, w_n, bias)) in enumerate(zip(blocks, params)):
            w = jnp.concatenate([w_s, w_n], axis=1).astype(jnp.bfloat16)
            f_out = w_s.shape[1]
            hw = jnp.dot(h_bf, w, preferred_element_type=jnp.float32)
            neigh = jnp.dot(a.astype(jnp.bfloat16),
                            hw[:, f_out:].astype(jnp.bfloat16),
                            preferred_element_type=jnp.float32)
            out = hw[:, :f_out] + neigh + bias.astype(jnp.float32)
            if l != n_layers - 1:
                out = jnp.maximum(out, 0.0)
                h_bf = out.astype(jnp.bfloat16)
        return out

    h = x.astype(jnp.float32)
    for l, (a, (w_s, w_n, bias)) in enumerate(zip(blocks, params)):
        a32 = a.astype(jnp.float32)
        out = h @ w_s + (a32 @ h) @ w_n + bias
        if l != n_layers - 1:
            out = jnp.maximum(out, 0.0)
        h = out
    return h


def make_params(key, dims):
    """dims = [in_feats, hidden, ..., classes] -> list of (W_self, W_neigh, bias)."""
    params = []
    for f_in, f_out in zip(dims[:-1], dims[1:]):
        key, k1, k2, k3 = jax.random.split(key, 4)
        scale = 1.0 / jnp.sqrt(jnp.float32(f_in))
        w_s = jax.random.normal(k1, (f_in, f_out), jnp.float32) * scale
        w_n = jax.random.normal(k2, (f_in, f_out), jnp.float32) * scale
        b = jax.random.normal(k3, (1, f_out), jnp.float32) * 0.1
        params.append((w_s, w_n, b))
    return params


def make_block(key, n):
    """Dense row-normalized adjacency (mean aggregation): A[i, j] = 1/deg(i)."""
    adj = (jax.random.uniform(key, (n, n)) < 0.05).astype(jnp.float32)
    # ring edges guarantee every node has at least one in-neighbor
    ring = jnp.roll(jnp.eye(n, dtype=jnp.float32), 1, axis=1)
    adj = jnp.clip(adj + ring, 0.0, 1.0)
    deg = adj.sum(axis=1, keepdims=True)
    return adj / jnp.maximum(deg, 1.0)


if __name__ == "__main__":
    N = 128          # nodes
    IN_FEATS = 16
    N_HIDDEN = 32
    N_CLASSES = 8
    N_LAYERS = 3     # in->hidden, hidden->hidden, hidden->classes

    key = jax.random.PRNGKey(0)
    kx, kp, *kb = jax.random.split(key, 2 + N_LAYERS)

    x_f32 = jax.random.normal(kx, (N, IN_FEATS), jnp.float32)
    dims = [IN_FEATS] + [N_HIDDEN] * (N_LAYERS - 1) + [N_CLASSES]
    params = make_params(kp, dims)
    blocks_f32 = [make_block(k, N) for k in kb]

    # One-time upstream casts (data-pipeline / model-load time, not per call).
    x_bf = x_f32.astype(jnp.bfloat16)
    blocks_bf = [a.astype(jnp.bfloat16) for a in blocks_f32]
    packed = pack_params(params)

    out = sage_forward(blocks_bf, x_bf, packed)
    out = jax.block_until_ready(out)
    assert out.shape == (N, N_CLASSES), out.shape

    # Tight check vs a reference that mirrors the kernel's bf16 math exactly.
    ref_bf16 = sage_forward_ref(blocks_bf, x_bf, params, mirror_kernel=True)
    assert jnp.allclose(out, ref_bf16, atol=2e-2, rtol=2e-2), "mismatch vs bf16 reference"
    # Loose check vs the full-f32 math of the original module.
    ref_f32 = sage_forward_ref(blocks_f32, x_f32, params, mirror_kernel=False)
    assert jnp.allclose(out, ref_f32, atol=1e-1, rtol=1e-1), "mismatch vs f32 reference"

    print("KERNEL_OK")
</pallas_src>

<mosaic_0001>
module attributes {stable_mosaic.version = 11 : i64} {
  func.func @fused_sage_kernel(%arg0: memref<128x128xbf16, #tpu.memory_space<vmem>>, %arg1: memref<128x128xbf16, #tpu.memory_space<vmem>>, %arg2: memref<128x128xbf16, #tpu.memory_space<vmem>>, %arg3: memref<128x16xbf16, #tpu.memory_space<vmem>>, %arg4: memref<16x64xbf16, #tpu.memory_space<vmem>>, %arg5: memref<1x32xf32, #tpu.memory_space<vmem>>, %arg6: memref<32x64xbf16, #tpu.memory_space<vmem>>, %arg7: memref<1x32xf32, #tpu.memory_space<vmem>>, %arg8: memref<32x16xbf16, #tpu.memory_space<vmem>>, %arg9: memref<1x8xf32, #tpu.memory_space<vmem>>, %arg10: memref<128x8xf32, #tpu.memory_space<vmem>>) attributes {dimension_semantics = [], scalar_prefetch = 0 : i64, scratch_operands = 0 : i64, tpu.core_type = #tpu.core_type<tc>} {
    %c0 = arith.constant 0 : index
    %c0_0 = arith.constant 0 : index
    %0 = vector.load %arg3[%c0, %c0_0] : memref<128x16xbf16, #tpu.memory_space<vmem>>, vector<128x16xbf16>
    %c0_1 = arith.constant 0 : index
    %c0_2 = arith.constant 0 : index
    %1 = vector.load %arg4[%c0_1, %c0_2] : memref<16x64xbf16, #tpu.memory_space<vmem>>, vector<16x64xbf16>
    %c0_3 = arith.constant 0 : index
    %c0_4 = arith.constant 0 : index
    %2 = vector.load %arg5[%c0_3, %c0_4] : memref<1x32xf32, #tpu.memory_space<vmem>>, vector<1x32xf32>
    %c0_5 = arith.constant 0 : index
    %c0_6 = arith.constant 0 : index
    %3 = vector.load %arg0[%c0_5, %c0_6] : memref<128x128xbf16, #tpu.memory_space<vmem>>, vector<128x128xbf16>
    %cst = arith.constant dense<0.000000e+00> : vector<128x64xf32>
    %4 = tpu.matmul %0, %1, %cst {dimension_numbers = #tpu.dot_dimension_numbers<[1], [0], [0], [1], [0, 0, 1, 1], [], []>} : vector<128x16xbf16>, vector<16x64xbf16>, vector<128x64xf32> -> vector<128x64xf32>
    %5 = vector.extract_strided_slice %4 {offsets = [0, 32], sizes = [128, 32], strides = [1, 1]} : vector<128x64xf32> to vector<128x32xf32>
    %6 = arith.truncf %5 : vector<128x32xf32> to vector<128x32xbf16>
    %cst_7 = arith.constant dense<0.000000e+00> : vector<128x32xf32>
    %7 = tpu.matmul %3, %6, %cst_7 {dimension_numbers = #tpu.dot_dimension_numbers<[1], [0], [0], [1], [0, 0, 1, 1], [], []>} : vector<128x128xbf16>, vector<128x32xbf16>, vector<128x32xf32> -> vector<128x32xf32>
    %8 = vector.extract_strided_slice %4 {offsets = [0, 0], sizes = [128, 32], strides = [1, 1]} : vector<128x64xf32> to vector<128x32xf32>
    %9 = arith.addf %8, %7 : vector<128x32xf32>
    %10 = vector.broadcast %2 : vector<1x32xf32> to vector<128x32xf32>
    %11 = arith.addf %9, %10 : vector<128x32xf32>
    %cst_8 = arith.constant 0.000000e+00 : f32
    %12 = vector.broadcast %cst_8 : f32 to vector<128x32xf32>
    %13 = arith.maximumf %11, %12 : vector<128x32xf32>
    %14 = arith.truncf %13 : vector<128x32xf32> to vector<128x32xbf16>
    %c0_9 = arith.constant 0 : index
    %c0_10 = arith.constant 0 : index
    %15 = vector.load %arg6[%c0_9, %c0_10] : memref<32x64xbf16, #tpu.memory_space<vmem>>, vector<32x64xbf16>
    %c0_11 = arith.constant 0 : index
    %c0_12 = arith.constant 0 : index
    %16 = vector.load %arg7[%c0_11, %c0_12] : memref<1x32xf32, #tpu.memory_space<vmem>>, vector<1x32xf32>
    %c0_13 = arith.constant 0 : index
    %c0_14 = arith.constant 0 : index
    %17 = vector.load %arg1[%c0_13, %c0_14] : memref<128x128xbf16, #tpu.memory_space<vmem>>, vector<128x128xbf16>
    %cst_15 = arith.constant dense<0.000000e+00> : vector<128x64xf32>
    %18 = tpu.matmul %14, %15, %cst_15 {dimension_numbers = #tpu.dot_dimension_numbers<[1], [0], [0], [1], [0, 0, 1, 1], [], []>} : vector<128x32xbf16>, vector<32x64xbf16>, vector<128x64xf32> -> vector<128x64xf32>
    %19 = vector.extract_strided_slice %18 {offsets = [0, 32], sizes = [128, 32], strides = [1, 1]} : vector<128x64xf32> to vector<128x32xf32>
    %20 = arith.truncf %19 : vector<128x32xf32> to vector<128x32xbf16>
    %cst_16 = arith.constant dense<0.000000e+00> : vector<128x32xf32>
    %21 = tpu.matmul %17, %20, %cst_16 {dimension_numbers = #tpu.dot_dimension_numbers<[1], [0], [0], [1], [0, 0, 1, 1], [], []>} : vector<128x128xbf16>, vector<128x32xbf16>, vector<128x32xf32> -> vector<128x32xf32>
    %22 = vector.extract_strided_slice %18 {offsets = [0, 0], sizes = [128, 32], strides = [1, 1]} : vector<128x64xf32> to vector<128x32xf32>
    %23 = arith.addf %22, %21 : vector<128x32xf32>
    %24 = vector.broadcast %16 : vector<1x32xf32> to vector<128x32xf32>
    %25 = arith.addf %23, %24 : vector<128x32xf32>
    %cst_17 = arith.constant 0.000000e+00 : f32
    %26 = vector.broadcast %cst_17 : f32 to vector<128x32xf32>
    %27 = arith.maximumf %25, %26 : vector<128x32xf32>
    %28 = arith.truncf %27 : vector<128x32xf32> to vector<128x32xbf16>
    %c0_18 = arith.constant 0 : index
    %c0_19 = arith.constant 0 : index
    %29 = vector.load %arg8[%c0_18, %c0_19] : memref<32x16xbf16, #tpu.memory_space<vmem>>, vector<32x16xbf16>
    %c0_20 = arith.constant 0 : index
    %c0_21 = arith.constant 0 : index
    %30 = vector.load %arg9[%c0_20, %c0_21] : memref<1x8xf32, #tpu.memory_space<vmem>>, vector<1x8xf32>
    %c0_22 = arith.constant 0 : index
    %c0_23 = arith.constant 0 : index
    %31 = vector.load %arg2[%c0_22, %c0_23] : memref<128x128xbf16, #tpu.memory_space<vmem>>, vector<128x128xbf16>
    %cst_24 = arith.constant dense<0.000000e+00> : vector<128x16xf32>
    %32 = tpu.matmul %28, %29, %cst_24 {dimension_numbers = #tpu.dot_dimension_numbers<[1], [0], [0], [1], [0, 0, 1, 1], [], []>} : vector<128x32xbf16>, vector<32x16xbf16>, vector<128x16xf32> -> vector<128x16xf32>
    %33 = vector.extract_strided_slice %32 {offsets = [0, 8], sizes = [128, 8], strides = [1, 1]} : vector<128x16xf32> to vector<128x8xf32>
    %34 = arith.truncf %33 : vector<128x8xf32> to vector<128x8xbf16>
    %cst_25 = arith.constant dense<0.000000e+00> : vector<128x8xf32>
    %35 = tpu.matmul %31, %34, %cst_25 {dimension_numbers = #tpu.dot_dimension_numbers<[1], [0], [0], [1], [0, 0, 1, 1], [], []>} : vector<128x128xbf16>, vector<128x8xbf16>, vector<128x8xf32> -> vector<128x8xf32>
    %36 = vector.extract_strided_slice %32 {offsets = [0, 0], sizes = [128, 8], strides = [1, 1]} : vector<128x16xf32> to vector<128x8xf32>
    %37 = arith.addf %36, %35 : vector<128x8xf32>
    %38 = vector.broadcast %30 : vector<1x8xf32> to vector<128x8xf32>
    %39 = arith.addf %37, %38 : vector<128x8xf32>
    %c0_26 = arith.constant 0 : index
    %c0_27 = arith.constant 0 : index
    %40 = vector.load %arg10[%c0_26, %c0_27] : memref<128x8xf32, #tpu.memory_space<vmem>>, vector<128x8xf32>
    tpu.vector_store %arg10[%c0_26, %c0_27], %39 {strides = array<i32>} : memref<128x8xf32, #tpu.memory_space<vmem>>, vector<128x8xf32>,
    return
  }
}

</mosaic_0001>

<llo_original>
// kernel: tpu_custom_call.1
$region0: #{tpu_custom_call.1}
  #allocation0 [shape = 'u32[]', space=smem, size = 0x4, offset = 0x4, fixed_abs, tag = 'smem constant byte address 0x4 - core index']
  #allocation1 [shape = 'u32[72,128]{1,0:T(1,128)}', space=vmem, size = 0x9000, scoped, tag = 'internal scratch']
  %s0 = inlined_call_operand.vmem [shape: bf16[128,128], index: 0, kind: input, shape index: {}]
  %s1 = inlined_call_operand.hbm [shape: bf16[128,128], index: 1, kind: input, shape index: {}]
  %s2 = inlined_call_operand.hbm [shape: bf16[128,128], index: 2, kind: input, shape index: {}]
  %s3 = inlined_call_operand.vmem [shape: bf16[128,16], index: 3, kind: input, shape index: {}]
  %s4 = inlined_call_operand.vmem [shape: bf16[16,64], index: 4, kind: input, shape index: {}]
  %s5 = inlined_call_operand.vmem [shape: f32[1,32], index: 5, kind: input, shape index: {}]
  %s6 = inlined_call_operand.vmem [shape: bf16[32,64], index: 6, kind: input, shape index: {}]
  %s7 = inlined_call_operand.vmem [shape: f32[1,32], index: 7, kind: input, shape index: {}]
  %s8 = inlined_call_operand.vmem [shape: bf16[32,16], index: 8, kind: input, shape index: {}]
  %s9 = inlined_call_operand.vmem [shape: f32[1,8], index: 9, kind: input, shape index: {}]
  %s10 = inlined_call_operand.vmem [shape: f32[128,8], index: 10, kind: output, shape index: {}]
  %s11 = sld [smem:[#allocation0]]
  $region58: #{tpu_custom_call.1} parent=0
    _
  %s13 = ssub.s32 1, %s11
  %s14 = scalar_select 0, %s13, %s11
  $region1: #{tpu_custom_call.1} parent=0
    #allocation2 [shape = 'u8[32768]{0}', space=vmem, size = 0x8000, scoped, tag = 'input window, operand 1, single buffered']
    #allocation3 [shape = 's32[1]{0}', space=sflag, size = 0x4, scoped, tag = 'scoped memory for tpu_custom_call.1']
    #allocation4 [shape = 'u8[32768]{0}', space=vmem, size = 0x8000, scoped, tag = 'input window, operand 2, single buffered']
    #allocation5 [shape = 's32[1]{0}', space=sflag, size = 0x4, scoped, tag = 'scoped memory for tpu_custom_call.1']
    %15 = vsyncpa [#allocation3], 0
    %16 = vsyncpa [#allocation5], 0
    // Predicated region
    $region2: #{tpu_custom_call.1} parent=1 // pred_check
      _
    $region3: #{tpu_custom_call.1} parent=1 // pred_check_branch
      %18 = sbr.rel (0) target = $region5
    $region4: #{tpu_custom_call.1} parent=1 // pred_region
      _
    $region5: #{tpu_custom_call.1} parent=1 // pred_fallthru
      _
    // Predicated region
    $region6: #{tpu_custom_call.1} parent=1 // pred_check
      _
    $region7: #{tpu_custom_call.1} parent=1 // pred_check_branch
      %20 = sbr.rel (0) target = $region9
    $region8: #{tpu_custom_call.1} parent=1 // pred_region
      %22 = vsyncadd [#allocation3], 0
      %s23 = sshll.u32 %s1, 4
      %s24 = int_to_ptr.hbm [resolvable:$true] %s23
      %s25 = sshll.u32 [#allocation2], 4
      %s26 = int_to_ptr.vmem [resolvable:$true] %s25
      %31 = dma.hbm_to_vmem [thread:$0]  %s24, 1024, %s26, [#allocation3], 64, 64, 4
    $region9: #{tpu_custom_call.1} parent=1 // pred_fallthru
      _
    // Predicated region
    $region10: #{tpu_custom_call.1} parent=1 // pred_check
      _
    $region11: #{tpu_custom_call.1} parent=1 // pred_check_branch
      %33 = sbr.rel (0) target = $region13
    $region12: #{tpu_custom_call.1} parent=1 // pred_region
      %35 = vsyncadd [#allocation5], 0
      %s36 = sshll.u32 %s2, 4
      %s37 = int_to_ptr.hbm [resolvable:$true] %s36
      %s38 = sshll.u32 [#allocation4], 4
      %s39 = int_to_ptr.vmem [resolvable:$true] %s38
      %44 = dma.hbm_to_vmem [thread:$0]  %s37, 1024, %s39, [#allocation5], 64, 64, 4
    $region13: #{tpu_custom_call.1} parent=1 // pred_fallthru
      _
    // Predicated region
    $region14: #{tpu_custom_call.1} parent=1 // pred_check
      _
    $region15: #{tpu_custom_call.1} parent=1 // pred_check_branch
      %46 = sbr.rel (0) target = $region17
    $region16: #{tpu_custom_call.1} parent=1 // pred_region
      _
    $region17: #{tpu_custom_call.1} parent=1 // pred_fallthru
      _
    // Predicated region
    $region18: #{tpu_custom_call.1} parent=1 // pred_check
      _
    $region19: #{tpu_custom_call.1} parent=1 // pred_check_branch
      %48 = sbr.rel (0) target = $region21
    $region20: #{tpu_custom_call.1} parent=1 // pred_region
      _
    $region21: #{tpu_custom_call.1} parent=1 // pred_fallthru
      _
    // Predicated region
    $region22: #{tpu_custom_call.1} parent=1 // pred_check
      _
    $region23: #{tpu_custom_call.1} parent=1 // pred_check_branch
      %50 = sbr.rel (0) target = $region25
    $region24: #{tpu_custom_call.1} parent=1 // pred_region
      _
    $region25: #{tpu_custom_call.1} parent=1 // pred_fallthru
      _
    // Predicated region
    $region26: #{tpu_custom_call.1} parent=1 // pred_check
      _
    $region27: #{tpu_custom_call.1} parent=1 // pred_check_branch
      %52 = sbr.rel (0) target = $region29
    $region28: #{tpu_custom_call.1} parent=1 // pred_region
      _
    $region29: #{tpu_custom_call.1} parent=1 // pred_fallthru
      _
    // Predicated region
    $region30: #{tpu_custom_call.1} parent=1 // pred_check
      _
    $region31: #{tpu_custom_call.1} parent=1 // pred_check_branch
      %54 = sbr.rel (0) target = $region33
    $region32: #{tpu_custom_call.1} parent=1 // pred_region
      _
    $region33: #{tpu_custom_call.1} parent=1 // pred_fallthru
      _
    // Predicated region
    $region34: #{tpu_custom_call.1} parent=1 // pred_check
      _
    $region35: #{tpu_custom_call.1} parent=1 // pred_check_branch
      %56 = sbr.rel (0) target = $region37
    $region36: #{tpu_custom_call.1} parent=1 // pred_region
      _
    $region37: #{tpu_custom_call.1} parent=1 // pred_fallthru
      _
    // Predicated region
    $region38: #{tpu_custom_call.1} parent=1 // pred_check
      _
    $region39: #{tpu_custom_call.1} parent=1 // pred_check_branch
      %58 = sbr.rel (0) target = $region41
    $region40: #{tpu_custom_call.1} parent=1 // pred_region
      _
    $region41: #{tpu_custom_call.1} parent=1 // pred_fallthru
      _
    // Predicated region
    $region42: #{tpu_custom_call.1} parent=1 // pred_check
      _
    $region43: #{tpu_custom_call.1} parent=1 // pred_check_branch
      %60 = sbr.rel (0) target = $region45
    $region44: #{tpu_custom_call.1} parent=1 // pred_region
      %62 = dma.done [#allocation3], 1024
    $region45: #{tpu_custom_call.1} parent=1 // pred_fallthru
      _
    // Predicated region
    $region46: #{tpu_custom_call.1} parent=1 // pred_check
      _
    $region47: #{tpu_custom_call.1} parent=1 // pred_check_branch
      %64 = sbr.rel (0) target = $region49
    $region48: #{tpu_custom_call.1} parent=1 // pred_region
      %66 = dma.done [#allocation5], 1024
    $region49: #{tpu_custom_call.1} parent=1 // pred_fallthru
      _
    %v68 = vld [vmem:[%s3] sm:$0xf]
    %v69 = vld [vmem:[%s3 + $0x4] sm:$0xf]
    %v70 = vld [vmem:[%s3 + $0x8] sm:$0xf]
    %v71 = vld [vmem:[%s3 + $0xc] sm:$0xf]
    %v72 = vld [vmem:[%s3 + $0x10] sm:$0xf]
    %v73 = vld [vmem:[%s3 + $0x14] sm:$0xf]
    %v74 = vld [vmem:[%s3 + $0x18] sm:$0xf]
    %v75 = vld [vmem:[%s3 + $0x1c] sm:$0xf]
    %v76 = vld [vmem:[%s3 + $0x20] sm:$0xf]
    %v77 = vld [vmem:[%s3 + $0x24] sm:$0xf]
    %v78 = vld [vmem:[%s3 + $0x28] sm:$0xf]
    %v79 = vld [vmem:[%s3 + $0x2c] sm:$0xf]
    %v80 = vld [vmem:[%s3 + $0x30] sm:$0xf]
    %v81 = vld [vmem:[%s3 + $0x34] sm:$0xf]
    %v82 = vld [vmem:[%s3 + $0x38] sm:$0xf]
    %v83 = vld [vmem:[%s3 + $0x3c] sm:$0xf]
    %v84 = vld [vmem:[%s4] sm:$0xf]
    %v85 = vld [vmem:[%s4 + $0x4] sm:$0xf]
    %v86 = vld [vmem:[%s5] sm:$0x1]
    %v87 = vld [vmem:[%s0] sm:$0xf]
    %v88 = vld [vmem:[%s0 + $0x4] sm:$0xf]
    %v89 = vld [vmem:[%s0 + $0x8] sm:$0xf]
    %v90 = vld [vmem:[%s0 + $0xc] sm:$0xf]
    %v91 = vld [vmem:[%s0 + $0x10] sm:$0xf]
    %v92 = vld [vmem:[%s0 + $0x14] sm:$0xf]
    %v93 = vld [vmem:[%s0 + $0x18] sm:$0xf]
    %v94 = vld [vmem:[%s0 + $0x1c] sm:$0xf]
    %v95 = vld [vmem:[%s0 + $0x20] sm:$0xf]
    %v96 = vld [vmem:[%s0 + $0x24] sm:$0xf]
    %v97 = vld [vmem:[%s0 + $0x28] sm:$0xf]
    %v98 = vld [vmem:[%s0 + $0x2c] sm:$0xf]
    %v99 = vld [vmem:[%s0 + $0x30] sm:$0xf]
    %v100 = vld [vmem:[%s0 + $0x34] sm:$0xf]
    %v101 = vld [vmem:[%s0 + $0x38] sm:$0xf]
    %v102 = vld [vmem:[%s0 + $0x3c] sm:$0xf]
    %v119 = vunpack.c.l.b16 %v68
    %v120 = vunpack.c.l.b16 %v69
    %v121 = vunpack.c.l.b16 %v70
    %v122 = vunpack.c.l.b16 %v71
    %v123 = vunpack.c.l.b16 %v72
    %v124 = vunpack.c.l.b16 %v73
    %v125 = vunpack.c.l.b16 %v74
    %v126 = vunpack.c.l.b16 %v75
    %v127 = vunpack.c.l.b16 %v76
    %v128 = vunpack.c.l.b16 %v77
    %v129 = vunpack.c.l.b16 %v78
    %v130 = vunpack.c.l.b16 %v79
    %v131 = vunpack.c.l.b16 %v80
    %v132 = vunpack.c.l.b16 %v81
    %v133 = vunpack.c.l.b16 %v82
    %v134 = vunpack.c.l.b16 %v83
    %v135 = vpack.c.b16 %v120, %v119
    %v136 = vpack.c.b16 %v122, %v121
    %v137 = vpack.c.b16 %v124, %v123
    %v138 = vpack.c.b16 %v126, %v125
    %v139 = vpack.c.b16 %v128, %v127
    %v140 = vpack.c.b16 %v130, %v129
    %v141 = vpack.c.b16 %v132, %v131
    %v142 = vpack.c.b16 %v134, %v133
    %v145 = vunpack.c.l.b16 %v84
    %v146 = vunpack.c.l.b16 %v85
    %v147 = vpack.c.b16 %v146, %v145
    %vm149 = vcmask 130048
    %v151 = vsel %vm149, %v135, 0
    %v154 = vsel %vm149, %v136, 0
    %v157 = vsel %vm149, %v137, 0
    %v160 = vsel %vm149, %v138, 0
    %v163 = vsel %vm149, %v139, 0
    %v166 = vsel %vm149, %v140, 0
    %v169 = vsel %vm149, %v141, 0
    %v172 = vsel %vm149, %v142, 0
    %174 = vmatpush.bf16.msra.mxu0 0
    %175 = vmatpush.bf16.msra.mxu0 0
    %176 = vmatpush.bf16.msra.mxu0 0
    %177 = vmatpush.bf16.msra.mxu0 0
    %178 = vmatpush.bf16.msra.mxu0 0
    %179 = vmatpush.bf16.msra.mxu0 0
    %180 = vmatpush.bf16.msra.mxu0 0
    %181 = vmatpush.bf16.msra.mxu0 %v147
    %182 = vmatmul.bf16.gmra.mxu0 %v151
    %v183 = vpop.f32.mrf.mxu0
    %v184 = vadd.f32 0.0, %v183
    %v185 = vpop.f32.mrf.mxu0
    %v186 = vadd.f32 0.0, %v185
    %187 = vmatmul.bf16.gmra.mxu0 %v154
    %v188 = vpop.f32.mrf.mxu0
    %v189 = vadd.f32 0.0, %v188
    %v190 = vpop.f32.mrf.mxu0
    %v191 = vadd.f32 0.0, %v190
    %192 = vmatmul.bf16.gmra.mxu0 %v157
    %v193 = vpop.f32.mrf.mxu0
    %v194 = vadd.f32 0.0, %v193
    %v195 = vpop.f32.mrf.mxu0
    %v196 = vadd.f32 0.0, %v195
    %197 = vmatmul.bf16.gmra.mxu0 %v160
    %v198 = vpop.f32.mrf.mxu0
    %v199 = vadd.f32 0.0, %v198
    %v200 = vpop.f32.mrf.mxu0
    %v201 = vadd.f32 0.0, %v200
    %202 = vmatmul.bf16.gmra.mxu0 %v163
    %v203 = vpop.f32.mrf.mxu0
    %v204 = vadd.f32 0.0, %v203
    %v205 = vpop.f32.mrf.mxu0
    %v206 = vadd.f32 0.0, %v205
    %207 = vmatmul.bf16.gmra.mxu0 %v166
    %v208 = vpop.f32.mrf.mxu0
    %v209 = vadd.f32 0.0, %v208
    %v210 = vpop.f32.mrf.mxu0
    %v211 = vadd.f32 0.0, %v210
    %212 = vmatmul.bf16.gmra.mxu0 %v169
    %v213 = vpop.f32.mrf.mxu0
    %v214 = vadd.f32 0.0, %v213
    %v215 = vpop.f32.mrf.mxu0
    %v216 = vadd.f32 0.0, %v215
    %217 = vmatmul.bf16.gmra.mxu0 %v172
    %v218 = vpop.f32.mrf.mxu0
    %v219 = vadd.f32 0.0, %v218
    %v220 = vpop.f32.mrf.mxu0
    %v221 = vadd.f32 0.0, %v220
    %222 = vdwg.mxu0
    %v223 = vpack.c.bf16 %v186, %v184
    %v224 = vpack.c.bf16 %v191, %v189
    %v225 = vpack.c.bf16 %v196, %v194
    %v226 = vpack.c.bf16 %v201, %v199
    %v227 = vpack.c.bf16 %v206, %v204
    %v228 = vpack.c.bf16 %v211, %v209
    %v229 = vpack.c.bf16 %v216, %v214
    %v230 = vpack.c.bf16 %v221, %v219
    %v247 = vunpack.c.l.b16 %v87
    %v248 = vunpack.c.l.b16 %v88
    %v249 = vunpack.c.l.b16 %v89
    %v250 = vunpack.c.l.b16 %v90
    %v251 = vunpack.c.l.b16 %v91
    %v252 = vunpack.c.l.b16 %v92
    %v253 = vunpack.c.l.b16 %v93
    %v254 = vunpack.c.l.b16 %v94
    %v255 = vunpack.c.l.b16 %v95
    %v256 = vunpack.c.l.b16 %v96
    %v257 = vunpack.c.l.b16 %v97
    %v258 = vunpack.c.l.b16 %v98
    %v259 = vunpack.c.l.b16 %v99
    %v260 = vunpack.c.l.b16 %v100
    %v261 = vunpack.c.l.b16 %v101
    %v262 = vunpack.c.l.b16 %v102
    %v263 = vpack.c.b16 %v248, %v247
    %v264 = vpack.c.b16 %v250, %v249
    %v265 = vpack.c.b16 %v252, %v251
    %v266 = vpack.c.b16 %v254, %v253
    %v267 = vpack.c.b16 %v256, %v255
    %v268 = vpack.c.b16 %v258, %v257
    %v269 = vpack.c.b16 %v260, %v259
    %v270 = vpack.c.b16 %v262, %v261
    %287 = vrot.lane.b32.xlu0 %v223, 96
    %v288 = vpop.permute.xlu0 %287
    %289 = vrot.lane.b32.xlu0 %v224, 96
    %v290 = vpop.permute.xlu0 %289
    %291 = vrot.lane.b32.xlu0 %v225, 96
    %v292 = vpop.permute.xlu0 %291
    %293 = vrot.lane.b32.xlu0 %v226, 96
    %v294 = vpop.permute.xlu0 %293
    %295 = vrot.lane.b32.xlu0 %v227, 96
    %v296 = vpop.permute.xlu0 %295
    %297 = vrot.lane.b32.xlu0 %v228, 96
    %v298 = vpop.permute.xlu0 %297
    %299 = vrot.lane.b32.xlu0 %v229, 96
    %v300 = vpop.permute.xlu0 %299
    %301 = vrot.lane.b32.xlu0 %v230, 96
    %v302 = vpop.permute.xlu0 %301
    %311 = vmatpush.bf16.msra.mxu0 %v302
    %312 = vmatpush.bf16.msra.mxu0 %v300
    %313 = vmatpush.bf16.msra.mxu0 %v298
    %314 = vmatpush.bf16.msra.mxu0 %v296
    %315 = vmatpush.bf16.msra.mxu0 %v294
    %316 = vmatpush.bf16.msra.mxu0 %v292
    %317 = vmatpush.bf16.msra.mxu0 %v290
    %318 = vmatpush.bf16.msra.mxu0 %v288
    %319 = vmatmul.bf16.gmra.mxu0 %v263
    %v320 = vpop.f32.mrf.mxu0
    %v321 = vadd.f32 0.0, %v320
    %v322 = vpop.f32.mrf.mxu0
    %v323 = vadd.f32 0.0, %v322
    %324 = vmatmul.bf16.gmra.mxu0 %v264
    %v325 = vpop.f32.mrf.mxu0
    %v326 = vadd.f32 0.0, %v325
    %v327 = vpop.f32.mrf.mxu0
    %v328 = vadd.f32 0.0, %v327
    %329 = vmatmul.bf16.gmra.mxu0 %v265
    %v330 = vpop.f32.mrf.mxu0
    %v331 = vadd.f32 0.0, %v330
    %v332 = vpop.f32.mrf.mxu0
    %v333 = vadd.f32 0.0, %v332
    %334 = vmatmul.bf16.gmra.mxu0 %v266
    %v335 = vpop.f32.mrf.mxu0
    %v336 = vadd.f32 0.0, %v335
    %v337 = vpop.f32.mrf.mxu0
    %v338 = vadd.f32 0.0, %v337
    %339 = vmatmul.bf16.gmra.mxu0 %v267
    %v340 = vpop.f32.mrf.mxu0
    %v341 = vadd.f32 0.0, %v340
    %v342 = vpop.f32.mrf.mxu0
    %v343 = vadd.f32 0.0, %v342
    %344 = vmatmul.bf16.gmra.mxu0 %v268
    %v345 = vpop.f32.mrf.mxu0
    %v346 = vadd.f32 0.0, %v345
    %v347 = vpop.f32.mrf.mxu0
    %v348 = vadd.f32 0.0, %v347
    %349 = vmatmul.bf16.gmra.mxu0 %v269
    %v350 = vpop.f32.mrf.mxu0
    %v351 = vadd.f32 0.0, %v350
    %v352 = vpop.f32.mrf.mxu0
    %v353 = vadd.f32 0.0, %v352
    %354 = vmatmul.bf16.gmra.mxu0 %v270
    %v355 = vpop.f32.mrf.mxu0
    %v356 = vadd.f32 0.0, %v355
    %v357 = vpop.f32.mrf.mxu0
    %v358 = vadd.f32 0.0, %v357
    %359 = vdwg.mxu0
    %v360 = vadd.f32 %v184, %v321
    %v361 = vadd.f32 %v186, %v323
    %v362 = vadd.f32 %v189, %v326
    %v363 = vadd.f32 %v191, %v328
    %v364 = vadd.f32 %v194, %v331
    %v365 = vadd.f32 %v196, %v333
    %v366 = vadd.f32 %v199, %v336
    %v367 = vadd.f32 %v201, %v338
    %v368 = vadd.f32 %v204, %v341
    %v369 = vadd.f32 %v206, %v343
    %v370 = vadd.f32 %v209, %v346
    %v371 = vadd.f32 %v211, %v348
    %v372 = vadd.f32 %v214, %v351
    %v373 = vadd.f32 %v216, %v353
    %v374 = vadd.f32 %v219, %v356
    %v375 = vadd.f32 %v221, %v358
    %v377 = vperm.slane %v86, 0
    %v379 = vadd.f32 %v360, %v377
    %v380 = vadd.f32 %v361, %v377
    %v381 = vadd.f32 %v362, %v377
    %v382 = vadd.f32 %v363, %v377
    %v383 = vadd.f32 %v364, %v377
    %v384 = vadd.f32 %v365, %v377
    %v385 = vadd.f32 %v366, %v377
    %v386 = vadd.f32 %v367, %v377
    %v387 = vadd.f32 %v368, %v377
    %v388 = vadd.f32 %v369, %v377
    %v389 = vadd.f32 %v370, %v377
    %v390 = vadd.f32 %v371, %v377
    %v391 = vadd.f32 %v372, %v377
    %v392 = vadd.f32 %v373, %v377
    %v393 = vadd.f32 %v374, %v377
    %v394 = vadd.f32 %v375, %v377
    %v395 = vmax.f32 %v379, 0.0
    %v396 = vmax.f32 %v380, 0.0
    %v397 = vmax.f32 %v381, 0.0
    %v398 = vmax.f32 %v382, 0.0
    %v399 = vmax.f32 %v383, 0.0
    %v400 = vmax.f32 %v384, 0.0
    %v401 = vmax.f32 %v385, 0.0
    %v402 = vmax.f32 %v386, 0.0
    %v403 = vmax.f32 %v387, 0.0
    %v404 = vmax.f32 %v388, 0.0
    %v405 = vmax.f32 %v389, 0.0
    %v406 = vmax.f32 %v390, 0.0
    %v407 = vmax.f32 %v391, 0.0
    %v408 = vmax.f32 %v392, 0.0
    %v409 = vmax.f32 %v393, 0.0
    %v410 = vmax.f32 %v394, 0.0
    %v411 = vpack.c.bf16 %v396, %v395
    %v412 = vpack.c.bf16 %v398, %v397
    %v413 = vpack.c.bf16 %v400, %v399
    %v414 = vpack.c.bf16 %v402, %v401
    %v415 = vpack.c.bf16 %v404, %v403
    %v416 = vpack.c.bf16 %v406, %v405
    %v417 = vpack.c.bf16 %v408, %v407
    %v418 = vpack.c.bf16 %v410, %v409
    %v419 = vld [vmem:[%s6] sm:$0xf]
    %v420 = vld [vmem:[%s6 + $0x4] sm:$0xf]
    %v421 = vld [vmem:[%s6 + $0x8] sm:$0xf]
    %v422 = vld [vmem:[%s6 + $0xc] sm:$0xf]
    %v423 = vld [vmem:[%s7] sm:$0x1]
    %v424 = vld [vmem:[#allocation2] sm:$0xf]
    %v425 = vld [vmem:[#allocation2 + $0x4] sm:$0xf]
    %v426 = vld [vmem:[#allocation2 + $0x8] sm:$0xf]
    %v427 = vld [vmem:[#allocation2 + $0xc] sm:$0xf]
    %v428 = vld [vmem:[#allocation2 + $0x10] sm:$0xf]
    %v429 = vld [vmem:[#allocation2 + $0x14] sm:$0xf]
    %v430 = vld [vmem:[#allocation2 + $0x18] sm:$0xf]
    %v431 = vld [vmem:[#allocation2 + $0x1c] sm:$0xf]
    %v432 = vld [vmem:[#allocation2 + $0x20] sm:$0xf]
    %v433 = vld [vmem:[#allocation2 + $0x24] sm:$0xf]
    %v434 = vld [vmem:[#allocation2 + $0x28] sm:$0xf]
    %v435 = vld [vmem:[#allocation2 + $0x2c] sm:$0xf]
    %v436 = vld [vmem:[#allocation2 + $0x30] sm:$0xf]
    %v437 = vld [vmem:[#allocation2 + $0x34] sm:$0xf]
    %v438 = vld [vmem:[#allocation2 + $0x38] sm:$0xf]
    %v439 = vld [vmem:[#allocation2 + $0x3c] sm:$0xf]
    %v444 = vunpack.c.l.b16 %v419
    %v445 = vunpack.c.l.b16 %v420
    %v446 = vunpack.c.l.b16 %v421
    %v447 = vunpack.c.l.b16 %v422
    %v448 = vpack.c.b16 %v445, %v444
    %v449 = vpack.c.b16 %v447, %v446
    %vm452 = vcmask 261120
    %v454 = vsel %vm452, %v411, 0
    %v457 = vsel %vm452, %v412, 0
    %v460 = vsel %vm452, %v413, 0
    %v463 = vsel %vm452, %v414, 0
    %v466 = vsel %vm452, %v415, 0
    %v469 = vsel %vm452, %v416, 0
    %v472 = vsel %vm452, %v417, 0
    %v475 = vsel %vm452, %v418, 0
    %477 = vmatpush.bf16.msra.mxu0 0
    %478 = vmatpush.bf16.msra.mxu0 0
    %479 = vmatpush.bf16.msra.mxu0 0
    %480 = vmatpush.bf16.msra.mxu0 0
    %481 = vmatpush.bf16.msra.mxu0 0
    %482 = vmatpush.bf16.msra.mxu0 0
    %483 = vmatpush.bf16.msra.mxu0 %v449
    %484 = vmatpush.bf16.msra.mxu0 %v448
    %485 = vmatmul.bf16.gmra.mxu0 %v454
    %v486 = vpop.f32.mrf.mxu0
    %v487 = vadd.f32 0.0, %v486
    %v488 = vpop.f32.mrf.mxu0
    %v489 = vadd.f32 0.0, %v488
    %490 = vmatmul.bf16.gmra.mxu0 %v457
    %v491 = vpop.f32.mrf.mxu0
    %v492 = vadd.f32 0.0, %v491
    %v493 = vpop.f32.mrf.mxu0
    %v494 = vadd.f32 0.0, %v493
    %495 = vmatmul.bf16.gmra.mxu0 %v460
    %v496 = vpop.f32.mrf.mxu0
    %v497 = vadd.f32 0.0, %v496
    %v498 = vpop.f32.mrf.mxu0
    %v499 = vadd.f32 0.0, %v498
    %500 = vmatmul.bf16.gmra.mxu0 %v463
    %v501 = vpop.f32.mrf.mxu0
    %v502 = vadd.f32 0.0, %v501
    %v503 = vpop.f32.mrf.mxu0
    %v504 = vadd.f32 0.0, %v503
    %505 = vmatmul.bf16.gmra.mxu0 %v466
    %v506 = vpop.f32.mrf.mxu0
    %v507 = vadd.f32 0.0, %v506
    %v508 = vpop.f32.mrf.mxu0
    %v509 = vadd.f32 0.0, %v508
    %510 = vmatmul.bf16.gmra.mxu0 %v469
    %v511 = vpop.f32.mrf.mxu0
    %v512 = vadd.f32 0.0, %v511
    %v513 = vpop.f32.mrf.mxu0
    %v514 = vadd.f32 0.0, %v513
    %515 = vmatmul.bf16.gmra.mxu0 %v472
    %v516 = vpop.f32.mrf.mxu0
    %v517 = vadd.f32 0.0, %v516
    %v518 = vpop.f32.mrf.mxu0
    %v519 = vadd.f32 0.0, %v518
    %520 = vmatmul.bf16.gmra.mxu0 %v475
    %v521 = vpop.f32.mrf.mxu0
    %v522 = vadd.f32 0.0, %v521
    %v523 = vpop.f32.mrf.mxu0
    %v524 = vadd.f32 0.0, %v523
    %525 = vdwg.mxu0
    %v526 = vpack.c.bf16 %v489, %v487
    %v527 = vpack.c.bf16 %v494, %v492
    %v528 = vpack.c.bf16 %v499, %v497
    %v529 = vpack.c.bf16 %v504, %v502
    %v530 = vpack.c.bf16 %v509, %v507
    %v531 = vpack.c.bf16 %v514, %v512
    %v532 = vpack.c.bf16 %v519, %v517
    %v533 = vpack.c.bf16 %v524, %v522
    %v550 = vunpack.c.l.b16 %v424
    %v551 = vunpack.c.l.b16 %v425
    %v552 = vunpack.c.l.b16 %v426
    %v553 = vunpack.c.l.b16 %v427
    %v554 = vunpack.c.l.b16 %v428
    %v555 = vunpack.c.l.b16 %v429
    %v556 = vunpack.c.l.b16 %v430
    %v557 = vunpack.c.l.b16 %v431
    %v558 = vunpack.c.l.b16 %v432
    %v559 = vunpack.c.l.b16 %v433
    %v560 = vunpack.c.l.b16 %v434
    %v561 = vunpack.c.l.b16 %v435
    %v562 = vunpack.c.l.b16 %v436
    %v563 = vunpack.c.l.b16 %v437
    %v564 = vunpack.c.l.b16 %v438
    %v565 = vunpack.c.l.b16 %v439
    %v566 = vpack.c.b16 %v551, %v550
    %v567 = vpack.c.b16 %v553, %v552
    %v568 = vpack.c.b16 %v555, %v554
    %v569 = vpack.c.b16 %v557, %v556
    %v570 = vpack.c.b16 %v559, %v558
    %v571 = vpack.c.b16 %v561, %v560
    %v572 = vpack.c.b16 %v563, %v562
    %v573 = vpack.c.b16 %v565, %v564
    %590 = vrot.lane.b32.xlu0 %v526, 96
    %v591 = vpop.permute.xlu0 %590
    %592 = vrot.lane.b32.xlu0 %v527, 96
    %v593 = vpop.permute.xlu0 %592
    %594 = vrot.lane.b32.xlu0 %v528, 96
    %v595 = vpop.permute.xlu0 %594
    %596 = vrot.lane.b32.xlu0 %v529, 96
    %v597 = vpop.permute.xlu0 %596
    %598 = vrot.lane.b32.xlu0 %v530, 96
    %v599 = vpop.permute.xlu0 %598
    %600 = vrot.lane.b32.xlu0 %v531, 96
    %v601 = vpop.permute.xlu0 %600
    %602 = vrot.lane.b32.xlu0 %v532, 96
    %v603 = vpop.permute.xlu0 %602
    %604 = vrot.lane.b32.xlu0 %v533, 96
    %v605 = vpop.permute.xlu0 %604
    %614 = vmatpush.bf16.msra.mxu0 %v605
    %615 = vmatpush.bf16.msra.mxu0 %v603
    %616 = vmatpush.bf16.msra.mxu0 %v601
    %617 = vmatpush.bf16.msra.mxu0 %v599
    %618 = vmatpush.bf16.msra.mxu0 %v597
    %619 = vmatpush.bf16.msra.mxu0 %v595
    %620 = vmatpush.bf16.msra.mxu0 %v593
    %621 = vmatpush.bf16.msra.mxu0 %v591
    %622 = vmatmul.bf16.gmra.mxu0 %v566
    %v623 = vpop.f32.mrf.mxu0
    %v624 = vadd.f32 0.0, %v623
    %v625 = vpop.f32.mrf.mxu0
    %v626 = vadd.f32 0.0, %v625
    %627 = vmatmul.bf16.gmra.mxu0 %v567
    %v628 = vpop.f32.mrf.mxu0
    %v629 = vadd.f32 0.0, %v628
    %v630 = vpop.f32.mrf.mxu0
    %v631 = vadd.f32 0.0, %v630
    %632 = vmatmul.bf16.gmra.mxu0 %v568
    %v633 = vpop.f32.mrf.mxu0
    %v634 = vadd.f32 0.0, %v633
    %v635 = vpop.f32.mrf.mxu0
    %v636 = vadd.f32 0.0, %v635
    %637 = vmatmul.bf16.gmra.mxu0 %v569
    %v638 = vpop.f32.mrf.mxu0
    %v639 = vadd.f32 0.0, %v638
    %v640 = vpop.f32.mrf.mxu0
    %v641 = vadd.f32 0.0, %v640
    %642 = vmatmul.bf16.gmra.mxu0 %v570
    %v643 = vpop.f32.mrf.mxu0
    %v644 = vadd.f32 0.0, %v643
    %v645 = vpop.f32.mrf.mxu0
    %v646 = vadd.f32 0.0, %v645
    %647 = vmatmul.bf16.gmra.mxu0 %v571
    %v648 = vpop.f32.mrf.mxu0
    %v649 = vadd.f32 0.0, %v648
    %v650 = vpop.f32.mrf.mxu0
    %v651 = vadd.f32 0.0, %v650
    %652 = vmatmul.bf16.gmra.mxu0 %v572
    %v653 = vpop.f32.mrf.mxu0
    %v654 = vadd.f32 0.0, %v653
    %v655 = vpop.f32.mrf.mxu0
    %v656 = vadd.f32 0.0, %v655
    %657 = vmatmul.bf16.gmra.mxu0 %v573
    %v658 = vpop.f32.mrf.mxu0
    %v659 = vadd.f32 0.0, %v658
    %v660 = vpop.f32.mrf.mxu0
    %v661 = vadd.f32 0.0, %v660
    %662 = vdwg.mxu0
    %v663 = vadd.f32 %v487, %v624
    %v664 = vadd.f32 %v489, %v626
    %v665 = vadd.f32 %v492, %v629
    %v666 = vadd.f32 %v494, %v631
    %v667 = vadd.f32 %v497, %v634
    %v668 = vadd.f32 %v499, %v636
    %v669 = vadd.f32 %v502, %v639
    %v670 = vadd.f32 %v504, %v641
    %v671 = vadd.f32 %v507, %v644
    %v672 = vadd.f32 %v509, %v646
    %v673 = vadd.f32 %v512, %v649
    %v674 = vadd.f32 %v514, %v651
    %v675 = vadd.f32 %v517, %v654
    %v676 = vadd.f32 %v519, %v656
    %v677 = vadd.f32 %v522, %v659
    %v678 = vadd.f32 %v524, %v661
    %v680 = vperm.slane %v423, 0
    %v682 = vadd.f32 %v663, %v680
    %v683 = vadd.f32 %v664, %v680
    %v684 = vadd.f32 %v665, %v680
    %v685 = vadd.f32 %v666, %v680
    %v686 = vadd.f32 %v667, %v680
    %v687 = vadd.f32 %v668, %v680
    %v688 = vadd.f32 %v669, %v680
    %v689 = vadd.f32 %v670, %v680
    %v690 = vadd.f32 %v671, %v680
    %v691 = vadd.f32 %v672, %v680
    %v692 = vadd.f32 %v673, %v680
    %v693 = vadd.f32 %v674, %v680
    %v694 = vadd.f32 %v675, %v680
    %v695 = vadd.f32 %v676, %v680
    %v696 = vadd.f32 %v677, %v680
    %v697 = vadd.f32 %v678, %v680
    %v698 = vmax.f32 %v682, 0.0
    %v699 = vmax.f32 %v683, 0.0
    %v700 = vmax.f32 %v684, 0.0
    %v701 = vmax.f32 %v685, 0.0
    %v702 = vmax.f32 %v686, 0.0
    %v703 = vmax.f32 %v687, 0.0
    %v704 = vmax.f32 %v688, 0.0
    %v705 = vmax.f32 %v689, 0.0
    %v706 = vmax.f32 %v690, 0.0
    %v707 = vmax.f32 %v691, 0.0
    %v708 = vmax.f32 %v692, 0.0
    %v709 = vmax.f32 %v693, 0.0
    %v710 = vmax.f32 %v694, 0.0
    %v711 = vmax.f32 %v695, 0.0
    %v712 = vmax.f32 %v696, 0.0
    %v713 = vmax.f32 %v697, 0.0
    %v714 = vpack.c.bf16 %v699, %v698
    %v715 = vpack.c.bf16 %v701, %v700
    %v716 = vpack.c.bf16 %v703, %v702
    %v717 = vpack.c.bf16 %v705, %v704
    %v718 = vpack.c.bf16 %v707, %v706
    %v719 = vpack.c.bf16 %v709, %v708
    %v720 = vpack.c.bf16 %v711, %v710
    %v721 = vpack.c.bf16 %v713, %v712
    %v722 = vld [vmem:[%s8] sm:$0xf]
    %v723 = vld [vmem:[%s8 + $0x4] sm:$0xf]
    %v724 = vld [vmem:[%s8 + $0x8] sm:$0xf]
    %v725 = vld [vmem:[%s8 + $0xc] sm:$0xf]
    %v726 = vld [vmem:[%s9] sm:$0x1]
    %v727 = vld [vmem:[#allocation4] sm:$0xf]
    %v728 = vld [vmem:[#allocation4 + $0x4] sm:$0xf]
    %v729 = vld [vmem:[#allocation4 + $0x8] sm:$0xf]
    %v730 = vld [vmem:[#allocation4 + $0xc] sm:$0xf]
    %v731 = vld [vmem:[#allocation4 + $0x10] sm:$0xf]
    %v732 = vld [vmem:[#allocation4 + $0x14] sm:$0xf]
    %v733 = vld [vmem:[#allocation4 + $0x18] sm:$0xf]
    %v734 = vld [vmem:[#allocation4 + $0x1c] sm:$0xf]
    %v735 = vld [vmem:[#allocation4 + $0x20] sm:$0xf]
    %v736 = vld [vmem:[#allocation4 + $0x24] sm:$0xf]
    %v737 = vld [vmem:[#allocation4 + $0x28] sm:$0xf]
    %v738 = vld [vmem:[#allocation4 + $0x2c] sm:$0xf]
    %v739 = vld [vmem:[#allocation4 + $0x30] sm:$0xf]
    %v740 = vld [vmem:[#allocation4 + $0x34] sm:$0xf]
    %v741 = vld [vmem:[#allocation4 + $0x38] sm:$0xf]
    %v742 = vld [vmem:[#allocation4 + $0x3c] sm:$0xf]
    %v747 = vunpack.c.l.b16 %v722
    %v748 = vunpack.c.l.b16 %v723
    %v749 = vunpack.c.l.b16 %v724
    %v750 = vunpack.c.l.b16 %v725
    %v751 = vpack.c.b16 %v748, %v747
    %v752 = vpack.c.b16 %v750, %v749
    %v756 = vsel %vm452, %v714, 0
    %v759 = vsel %vm452, %v715, 0
    %v762 = vsel %vm452, %v716, 0
    %v765 = vsel %vm452, %v717, 0
    %v768 = vsel %vm452, %v718, 0
    %v771 = vsel %vm452, %v719, 0
    %v774 = vsel %vm452, %v720, 0
    %v777 = vsel %vm452, %v721, 0
    %779 = vmatpush.bf16.msra.mxu0 0
    %780 = vmatpush.bf16.msra.mxu0 0
    %781 = vmatpush.bf16.msra.mxu0 0
    %782 = vmatpush.bf16.msra.mxu0 0
    %783 = vmatpush.bf16.msra.mxu0 0
    %784 = vmatpush.bf16.msra.mxu0 0
    %785 = vmatpush.bf16.msra.mxu0 %v752
    %786 = vmatpush.bf16.msra.mxu0 %v751
    %787 = vmatmul.bf16.gmra.mxu0 %v756
    %v788 = vpop.f32.mrf.mxu0
    %v789 = vadd.f32 0.0, %v788
    %v790 = vpop.f32.mrf.mxu0
    %v791 = vadd.f32 0.0, %v790
    %792 = vmatmul.bf16.gmra.mxu0 %v759
    %v793 = vpop.f32.mrf.mxu0
    %v794 = vadd.f32 0.0, %v793
    %v795 = vpop.f32.mrf.mxu0
    %v796 = vadd.f32 0.0, %v795
    %797 = vmatmul.bf16.gmra.mxu0 %v762
    %v798 = vpop.f32.mrf.mxu0
    %v799 = vadd.f32 0.0, %v798
    %v800 = vpop.f32.mrf.mxu0
    %v801 = vadd.f32 0.0, %v800
    %802 = vmatmul.bf16.gmra.mxu0 %v765
    %v803 = vpop.f32.mrf.mxu0
    %v804 = vadd.f32 0.0, %v803
    %v805 = vpop.f32.mrf.mxu0
    %v806 = vadd.f32 0.0, %v805
    %807 = vmatmul.bf16.gmra.mxu0 %v768
    %v808 = vpop.f32.mrf.mxu0
    %v809 = vadd.f32 0.0, %v808
    %v810 = vpop.f32.mrf.mxu0
    %v811 = vadd.f32 0.0, %v810
    %812 = vmatmul.bf16.gmra.mxu0 %v771
    %v813 = vpop.f32.mrf.mxu0
    %v814 = vadd.f32 0.0, %v813
    %v815 = vpop.f32.mrf.mxu0
    %v816 = vadd.f32 0.0, %v815
    %817 = vmatmul.bf16.gmra.mxu0 %v774
    %v818 = vpop.f32.mrf.mxu0
    %v819 = vadd.f32 0.0, %v818
    %v820 = vpop.f32.mrf.mxu0
    %v821 = vadd.f32 0.0, %v820
    %822 = vmatmul.bf16.gmra.mxu0 %v777
    %v823 = vpop.f32.mrf.mxu0
    %v824 = vadd.f32 0.0, %v823
    %v825 = vpop.f32.mrf.mxu0
    %v826 = vadd.f32 0.0, %v825
    %827 = vdwg.mxu0
    %v828 = vpack.c.bf16 %v791, %v789
    %v829 = vpack.c.bf16 %v796, %v794
    %v830 = vpack.c.bf16 %v801, %v799
    %v831 = vpack.c.bf16 %v806, %v804
    %v832 = vpack.c.bf16 %v811, %v809
    %v833 = vpack.c.bf16 %v816, %v814
    %v834 = vpack.c.bf16 %v821, %v819
    %v835 = vpack.c.bf16 %v826, %v824
    %v852 = vunpack.c.l.b16 %v727
    %v853 = vunpack.c.l.b16 %v728
    %v854 = vunpack.c.l.b16 %v729
    %v855 = vunpack.c.l.b16 %v730
    %v856 = vunpack.c.l.b16 %v731
    %v857 = vunpack.c.l.b16 %v732
    %v858 = vunpack.c.l.b16 %v733
    %v859 = vunpack.c.l.b16 %v734
    %v860 = vunpack.c.l.b16 %v735
    %v861 = vunpack.c.l.b16 %v736
    %v862 = vunpack.c.l.b16 %v737
    %v863 = vunpack.c.l.b16 %v738
    %v864 = vunpack.c.l.b16 %v739
    %v865 = vunpack.c.l.b16 %v740
    %v866 = vunpack.c.l.b16 %v741
    %v867 = vunpack.c.l.b16 %v742
    %v868 = vpack.c.b16 %v853, %v852
    %v869 = vpack.c.b16 %v855, %v854
    %v870 = vpack.c.b16 %v857, %v856
    %v871 = vpack.c.b16 %v859, %v858
    %v872 = vpack.c.b16 %v861, %v860
    %v873 = vpack.c.b16 %v863, %v862
    %v874 = vpack.c.b16 %v865, %v864
    %v875 = vpack.c.b16 %v867, %v866
    %892 = vrot.lane.b32.xlu0 %v828, 120
    %v893 = vpop.permute.xlu0 %892
    %894 = vrot.lane.b32.xlu0 %v829, 120
    %v895 = vpop.permute.xlu0 %894
    %896 = vrot.lane.b32.xlu0 %v830, 120
    %v897 = vpop.permute.xlu0 %896
    %898 = vrot.lane.b32.xlu0 %v831, 120
    %v899 = vpop.permute.xlu0 %898
    %900 = vrot.lane.b32.xlu0 %v832, 120
    %v901 = vpop.permute.xlu0 %900
    %902 = vrot.lane.b32.xlu0 %v833, 120
    %v903 = vpop.permute.xlu0 %902
    %904 = vrot.lane.b32.xlu0 %v834, 120
    %v905 = vpop.permute.xlu0 %904
    %906 = vrot.lane.b32.xlu0 %v835, 120
    %v907 = vpop.permute.xlu0 %906
    %916 = vmatpush.bf16.msra.mxu0 %v907
    %917 = vmatpush.bf16.msra.mxu0 %v905
    %918 = vmatpush.bf16.msra.mxu0 %v903
    %919 = vmatpush.bf16.msra.mxu0 %v901
    %920 = vmatpush.bf16.msra.mxu0 %v899
    %921 = vmatpush.bf16.msra.mxu0 %v897
    %922 = vmatpush.bf16.msra.mxu0 %v895
    %923 = vmatpush.bf16.msra.mxu0 %v893
    %924 = vmatmul.bf16.gmra.mxu0 %v868
    %v925 = vpop.f32.mrf.mxu0
    %v926 = vadd.f32 0.0, %v925
    %v927 = vpop.f32.mrf.mxu0
    %v928 = vadd.f32 0.0, %v927
    %929 = vmatmul.bf16.gmra.mxu0 %v869
    %v930 = vpop.f32.mrf.mxu0
    %v931 = vadd.f32 0.0, %v930
    %v932 = vpop.f32.mrf.mxu0
    %v933 = vadd.f32 0.0, %v932
    %934 = vmatmul.bf16.gmra.mxu0 %v870
    %v935 = vpop.f32.mrf.mxu0
    %v936 = vadd.f32 0.0, %v935
    %v937 = vpop.f32.mrf.mxu0
    %v938 = vadd.f32 0.0, %v937
    %939 = vmatmul.bf16.gmra.mxu0 %v871
    %v940 = vpop.f32.mrf.mxu0
    %v941 = vadd.f32 0.0, %v940
    %v942 = vpop.f32.mrf.mxu0
    %v943 = vadd.f32 0.0, %v942
    %944 = vmatmul.bf16.gmra.mxu0 %v872
    %v945 = vpop.f32.mrf.mxu0
    %v946 = vadd.f32 0.0, %v945
    %v947 = vpop.f32.mrf.mxu0
    %v948 = vadd.f32 0.0, %v947
    %949 = vmatmul.bf16.gmra.mxu0 %v873
    %v950 = vpop.f32.mrf.mxu0
    %v951 = vadd.f32 0.0, %v950
    %v952 = vpop.f32.mrf.mxu0
    %v953 = vadd.f32 0.0, %v952
    %954 = vmatmul.bf16.gmra.mxu0 %v874
    %v955 = vpop.f32.mrf.mxu0
    %v956 = vadd.f32 0.0, %v955
    %v957 = vpop.f32.mrf.mxu0
    %v958 = vadd.f32 0.0, %v957
    %959 = vmatmul.bf16.gmra.mxu0 %v875
    %v960 = vpop.f32.mrf.mxu0
    %v961 = vadd.f32 0.0, %v960
    %v962 = vpop.f32.mrf.mxu0
    %v963 = vadd.f32 0.0, %v962
    %964 = vdwg.mxu0
    %v965 = vadd.f32 %v789, %v926
    %v966 = vadd.f32 %v791, %v928
    %v967 = vadd.f32 %v794, %v931
    %v968 = vadd.f32 %v796, %v933
    %v969 = vadd.f32 %v799, %v936
    %v970 = vadd.f32 %v801, %v938
    %v971 = vadd.f32 %v804, %v941
    %v972 = vadd.f32 %v806, %v943
    %v973 = vadd.f32 %v809, %v946
    %v974 = vadd.f32 %v811, %v948
    %v975 = vadd.f32 %v814, %v951
    %v976 = vadd.f32 %v816, %v953
    %v977 = vadd.f32 %v819, %v956
    %v978 = vadd.f32 %v821, %v958
    %v979 = vadd.f32 %v824, %v961
    %v980 = vadd.f32 %v826, %v963
    %v982 = vperm.slane %v726, 0
    %v984 = vadd.f32 %v965, %v982
    %v985 = vadd.f32 %v966, %v982
    %v986 = vadd.f32 %v967, %v982
    %v987 = vadd.f32 %v968, %v982
    %v988 = vadd.f32 %v969, %v982
    %v989 = vadd.f32 %v970, %v982
    %v990 = vadd.f32 %v971, %v982
    %v991 = vadd.f32 %v972, %v982
    %v992 = vadd.f32 %v973, %v982
    %v993 = vadd.f32 %v974, %v982
    %v994 = vadd.f32 %v975, %v982
    %v995 = vadd.f32 %v976, %v982
    %v996 = vadd.f32 %v977, %v982
    %v997 = vadd.f32 %v978, %v982
    %v998 = vadd.f32 %v979, %v982
    %v999 = vadd.f32 %v980, %v982
    %vm1000 = vcmask 64512
    %1001 = vst.msk [vmem:[%s10] sm:$0xff] %vm1000, %v984
    %1002 = vst.msk [vmem:[%s10 + $0x8] sm:$0xff] %vm1000, %v985
    %1003 = vst.msk [vmem:[%s10 + $0x10] sm:$0xff] %vm1000, %v986
    %1004 = vst.msk [vmem:[%s10 + $0x18] sm:$0xff] %vm1000, %v987
    %1005 = vst.msk [vmem:[%s10 + $0x20] sm:$0xff] %vm1000, %v988
    %1006 = vst.msk [vmem:[%s10 + $0x28] sm:$0xff] %vm1000, %v989
    %1007 = vst.msk [vmem:[%s10 + $0x30] sm:$0xff] %vm1000, %v990
    %1008 = vst.msk [vmem:[%s10 + $0x38] sm:$0xff] %vm1000, %v991
    %1009 = vst.msk [vmem:[%s10 + $0x40] sm:$0xff] %vm1000, %v992
    %1010 = vst.msk [vmem:[%s10 + $0x48] sm:$0xff] %vm1000, %v993
    %1011 = vst.msk [vmem:[%s10 + $0x50] sm:$0xff] %vm1000, %v994
    %1012 = vst.msk [vmem:[%s10 + $0x58] sm:$0xff] %vm1000, %v995
    %1013 = vst.msk [vmem:[%s10 + $0x60] sm:$0xff] %vm1000, %v996
    %1014 = vst.msk [vmem:[%s10 + $0x68] sm:$0xff] %vm1000, %v997
    %1015 = vst.msk [vmem:[%s10 + $0x70] sm:$0xff] %vm1000, %v998
    %1016 = vst.msk [vmem:[%s10 + $0x78] sm:$0xff] %vm1000, %v999
    // Predicated region
    $region50: #{tpu_custom_call.1} parent=1 // pred_check
      _
    $region51: #{tpu_custom_call.1} parent=1 // pred_check_branch
      %1018 = sbr.rel (0) target = $region53
    $region52: #{tpu_custom_call.1} parent=1 // pred_region
      _
    $region53: #{tpu_custom_call.1} parent=1 // pred_fallthru
      _
    // Predicated region
    $region54: #{tpu_custom_call.1} parent=1 // pred_check
      _
    $region55: #{tpu_custom_call.1} parent=1 // pred_check_branch
      %1020 = sbr.rel (0) target = $region57
    $region56: #{tpu_custom_call.1} parent=1 // pred_region
      _
    $region57: #{tpu_custom_call.1} parent=1 // pred_fallthru
      _
    %1021 = vsyncpa [#allocation3], 1
    %1022 = vsyncpa [#allocation5], 1

</llo_original>
